<compile_context>
chip_gen: v7x
topology: tpu7x:2x2x1
jax: 0.10.0
libtpu: 0.0.40
codegen_flags: <defaults>
</compile_context>

<pallas_src>
import functools
import math

import jax
import jax.numpy as jnp
from jax.experimental import pallas as pl
from jax.experimental.pallas import tpu as pltpu


# ----------------------------------------------------------------------------
# VMEM budgeting (generation aware: ~64 MiB/core on v7x, ~128 MiB on v5e/v6e)
# ----------------------------------------------------------------------------

@functools.lru_cache(maxsize=None)
def _vmem_budget():
    try:
        cap = int(pltpu.get_tpu_info().vmem_capacity_bytes)
    except Exception:
        cap = 64 * 1024 * 1024                         # conservative (v7x per-core)
    limit = min(int(cap * 0.75), cap - (8 << 20))      # leave compiler headroom
    tile_budget = int(cap * 0.35)                      # working-set budget for tiles
    return limit, tile_budget


def _compiler_params(dims):
    limit, _ = _vmem_budget()
    return pltpu.CompilerParams(dimension_semantics=dims, vmem_limit_bytes=limit)


def _largest_tile(total: int, quantum: int, cap: int) -> int:
    """Largest divisor of `total` that is a multiple of `quantum` and <= cap.
    Falls back to the full extent (always a legal block) if none exists.
    NOTE: callers should pad ragged M to a multiple of 8 for best tiling."""
    best = None
    t = quantum
    limit = min(total, cap)
    while t <= limit:
        if total % t == 0:
            best = t
        t += quantum
    return total if best is None else best


# ----------------------------------------------------------------------------
# One-time weight preparation (hoisted out of the forward path)
# ----------------------------------------------------------------------------

def prepare_params(raw, *, compute_dtype=None, ffn_tile_h=None):
    """Done once at weight-load time:
      * fuse wq/wk/wv into a single wqkv matmul weight,
      * interleave w1/w3 per FFN hidden tile into one [w1|w3] gate weight,
      * optionally cast the matmul weights to bf16 (f32 accumulation in kernels)."""
    compute_dtype = compute_dtype or raw["wq"].dtype
    D = raw["wq"].shape[0]
    H = raw["w1"].shape[1]
    itemsize = jnp.dtype(compute_dtype).itemsize
    _, budget = _vmem_budget()

    if ffn_tile_h is None:
        th = _largest_tile(H, 128, 2048)
        # keep double-buffered [w1|w3] + w2 tiles within ~60% of the tile budget
        while (th > 128 and 2 * (D * 2 * th + th * D) * itemsize > int(budget * 0.6)
               and (th // 2) % 128 == 0 and H % (th // 2) == 0):
            th //= 2
        ffn_tile_h = th
    n_h = H // ffn_tile_h

    wqkv = jnp.concatenate([raw["wq"], raw["wk"], raw["wv"]], axis=1)
    # interleave so column block k of w13 is exactly [w1_tile_k | w3_tile_k]
    w13 = jnp.concatenate(
        [raw["w1"].reshape(D, n_h, ffn_tile_h),
         raw["w3"].reshape(D, n_h, ffn_tile_h)], axis=2).reshape(D, 2 * H)

    cast = lambda w: w.astype(compute_dtype)
    return {
        "attention_norm": raw["attention_norm"].astype(jnp.float32),
        "ffn_norm": raw["ffn_norm"].astype(jnp.float32),
        "wqkv": cast(wqkv),
        "wo": cast(raw["wo"]),
        "w13": cast(w13),
        "w2": cast(raw["w2"]),
        "ffn_tile_h": ffn_tile_h,
    }


# ----------------------------------------------------------------------------
# Fused RMSNorm + linear projection (used for the QKV projection)
# ----------------------------------------------------------------------------

def _norm_linear_kernel(x_ref, nw_ref, w_ref, o_ref, *, eps):
    xf = x_ref[...].astype(jnp.float32)
    var = jnp.mean(xf * xf, axis=-1, keepdims=True)
    xn = (xf * jax.lax.rsqrt(var + eps) * nw_ref[...].astype(jnp.float32)
          ).astype(w_ref.dtype)
    o_ref[...] = jnp.dot(xn, w_ref[...],
                         preferred_element_type=jnp.float32).astype(o_ref.dtype)


def fused_norm_linear(x2d, norm_w, w, *, eps, out_dtype=None):
    """y = rmsnorm(x) @ w ; norm is recomputed per N tile inside the kernel (VPU-cheap)
    so the (M, D) normalized activation never round-trips through HBM."""
    M, K = x2d.shape
    K2, N = w.shape
    assert K == K2
    out_dtype = out_dtype or x2d.dtype
    _, budget = _vmem_budget()
    isz = jnp.dtype(w.dtype).itemsize

    tm = _largest_tile(M, 8, 512)
    tn = _largest_tile(N, 128, 512)

    def fp(tm_, tn_):   # double-buffered x / w / out tiles + norm weight
        return 2 * (tm_ * K * 4 + K * tn_ * isz + tm_ * tn_ * 4) + K * 4

    while tn > 128 and fp(tm, tn) > budget and (tn // 2) % 128 == 0 and N % (tn // 2) == 0:
        tn //= 2
    while tm > 8 and fp(tm, tn) > budget and (tm // 2) % 8 == 0 and M % (tm // 2) == 0:
        tm //= 2
    # megacore: keep >= 2 parallel grid steps when possible
    if N // tn < 2 and M >= 16 and M // tm < 2:
        tm = _largest_tile(M, 8, max(8, M // 2))

    return pl.pallas_call(
        functools.partial(_norm_linear_kernel, eps=eps),
        out_shape=jax.ShapeDtypeStruct((M, N), out_dtype),
        grid_spec=pltpu.PrefetchScalarGridSpec(
            num_scalar_prefetch=0,
            grid=(M // tm, N // tn),
            in_specs=[
                pl.BlockSpec((tm, K), lambda i, j: (i, 0)),
                pl.BlockSpec((1, K), lambda i, j: (0, 0)),
                pl.BlockSpec((K, tn), lambda i, j: (0, j)),
            ],
            out_specs=pl.BlockSpec((tm, tn), lambda i, j: (i, j)),
        ),
        compiler_params=_compiler_params(("parallel", "parallel")),
    )(x2d, norm_w.reshape(1, K), w)


# ----------------------------------------------------------------------------
# Generic linear: K-tiled (reduction axis last), f32 accumulator, fused residual
# ----------------------------------------------------------------------------

def _linear_res_kernel(x_ref, w_ref, res_ref, o_ref, acc_ref):
    k = pl.program_id(2)

    @pl.when(k == 0)
    def _():
        acc_ref[...] = jnp.zeros_like(acc_ref)

    acc_ref[...] += jnp.dot(x_ref[...].astype(w_ref.dtype), w_ref[...],
                            preferred_element_type=jnp.float32)

    @pl.when(k == pl.num_programs(2) - 1)
    def _():
        o_ref[...] = (res_ref[...].astype(jnp.float32) + acc_ref[...]).astype(o_ref.dtype)


def _linear_kernel(x_ref, w_ref, o_ref, acc_ref):
    k = pl.program_id(2)

    @pl.when(k == 0)
    def _():
        acc_ref[...] = jnp.zeros_like(acc_ref)

    acc_ref[...] += jnp.dot(x_ref[...].astype(w_ref.dtype), w_ref[...],
                            preferred_element_type=jnp.float32)

    @pl.when(k == pl.num_programs(2) - 1)
    def _():
        o_ref[...] = acc_ref[...].astype(o_ref.dtype)


def linear(x2d, w, *, residual=None, out_dtype=None):
    """y = x @ w (+ residual).  Tiles are picked from the VMEM budget; K is tiled as
    the last ("arbitrary") grid axis with a resident f32 VMEM accumulator."""
    M, K = x2d.shape
    K2, N = w.shape
    assert K == K2
    out_dtype = out_dtype or x2d.dtype
    _, budget = _vmem_budget()
    isz = jnp.dtype(w.dtype).itemsize
    xsz = jnp.dtype(x2d.dtype).itemsize

    tm = _largest_tile(M, 8, 256)
    tn = _largest_tile(N, 128, 256)            # MXU-native width on v6e/v7x
    tk = _largest_tile(K, 128, 1024)

    def fp(tm_, tn_, tk_):
        return (2 * (tm_ * tk_ * xsz + tk_ * tn_ * isz + 2 * tm_ * tn_ * 4)
                + tm_ * tn_ * 4)

    while tk > 128 and fp(tm, tn, tk) > budget and (tk // 2) % 128 == 0 and K % (tk // 2) == 0:
        tk //= 2
    while tn > 128 and fp(tm, tn, tk) > budget and (tn // 2) % 128 == 0 and N % (tn // 2) == 0:
        tn //= 2
    # megacore: keep >= 2 parallel grid steps when possible
    if (M // tm) * (N // tn) < 2 and M >= 16:
        tm = _largest_tile(M, 8, max(8, M // 2))

    has_res = residual is not None
    kernel = _linear_res_kernel if has_res else _linear_kernel
    in_specs = [
        pl.BlockSpec((tm, tk), lambda i, j, k: (i, k)),
        pl.BlockSpec((tk, tn), lambda i, j, k: (k, j)),
    ]
    args = [x2d, w]
    if has_res:
        in_specs.append(pl.BlockSpec((tm, tn), lambda i, j, k: (i, j)))
        args.append(residual)

    return pl.pallas_call(
        kernel,
        out_shape=jax.ShapeDtypeStruct((M, N), out_dtype),
        grid_spec=pltpu.PrefetchScalarGridSpec(
            num_scalar_prefetch=0,
            grid=(M // tm, N // tn, K // tk),
            in_specs=in_specs,
            out_specs=pl.BlockSpec((tm, tn), lambda i, j, k: (i, j)),
            scratch_shapes=[pltpu.VMEM((tm, tn), jnp.float32)],
        ),
        compiler_params=_compiler_params(("parallel", "parallel", "arbitrary")),
    )(*args)


# ----------------------------------------------------------------------------
# Flash-style attention core: online softmax over T tiles, GQA via index_map
# ----------------------------------------------------------------------------

def _flash_attn_kernel(q_ref, k_ref, v_ref, mask_ref, o_ref, m_sc, l_sc, acc_sc, *,
                       scale, approx_recip):
    t = pl.program_id(2)

    @pl.when(t == 0)
    def _():
        m_sc[...] = jnp.full(m_sc.shape, jnp.finfo(jnp.float32).min, dtype=jnp.float32)
        l_sc[...] = jnp.zeros(l_sc.shape, dtype=jnp.float32)
        acc_sc[...] = jnp.zeros(acc_sc.shape, dtype=jnp.float32)

    q = q_ref[...].astype(jnp.float32) * scale        # pre-scale q: (S, hd)
    k = k_ref[...].astype(jnp.float32)                # (tT, hd)
    s = jax.lax.dot_general(q, k, (((1,), (1,)), ((), ())),
                            preferred_element_type=jnp.float32)       # (S, tT)
    s = s + mask_ref[...]

    m_prev = m_sc[...]
    m_new = jnp.maximum(m_prev, jnp.max(s, axis=-1, keepdims=True))
    alpha = jnp.exp(m_prev - m_new)
    p = jnp.exp(s - m_new)
    l_sc[...] = alpha * l_sc[...] + jnp.sum(p, axis=-1, keepdims=True)
    acc_sc[...] = alpha * acc_sc[...] + jnp.dot(p.astype(v_ref.dtype), v_ref[...],
                                                preferred_element_type=jnp.float32)
    m_sc[...] = m_new

    @pl.when(t == pl.num_programs(2) - 1)
    def _():
        if approx_recip:
            o_ref[...] = (acc_sc[...] * pl.reciprocal(l_sc[...], approx=True)
                          ).astype(o_ref.dtype)
        else:
            o_ref[...] = (acc_sc[...] / l_sc[...]).astype(o_ref.dtype)


def attention_core(q, k, v, mask, *, scale, n_rep, approx_recip=False):
    """q: (B, H, S, hd); k, v: (B, Kv, T, hd) - NOT repeated for GQA; mask: (S, T).
    GQA: query head h reads kv head h // n_rep directly from the cache."""
    B, H, S, hd = q.shape
    Kv, T = k.shape[1], k.shape[2]
    assert H == Kv * n_rep

    _, budget = _vmem_budget()
    kv_isz = jnp.dtype(k.dtype).itemsize
    tT = _largest_tile(T, 128, 2048)

    def fp(tT_):       # double-buffered K/V + mask tiles + resident q / out / scratch
        return (4 * tT_ * hd * kv_isz + 2 * S * tT_ * 4
                + 3 * S * hd * 4 + S * (hd + 2) * 4)

    while tT > 128 and fp(tT) > budget and (tT // 2) % 128 == 0 and T % (tT // 2) == 0:
        tT //= 2

    # TODO(synk): skip fully-masked causal T tiles (needs structural mask knowledge).
    kernel = functools.partial(_flash_attn_kernel, scale=scale, approx_recip=approx_recip)
    return pl.pallas_call(
        kernel,
        out_shape=jax.ShapeDtypeStruct((B, H, S, hd), q.dtype),
        grid_spec=pltpu.PrefetchScalarGridSpec(
            num_scalar_prefetch=0,
            grid=(B, H, T // tT),
            in_specs=[
                pl.BlockSpec((None, None, S, hd), lambda b, h, t: (b, h, 0, 0)),
                pl.BlockSpec((None, None, tT, hd), lambda b, h, t: (b, h // n_rep, t, 0)),
                pl.BlockSpec((None, None, tT, hd), lambda b, h, t: (b, h // n_rep, t, 0)),
                pl.BlockSpec((S, tT), lambda b, h, t: (0, t)),
            ],
            out_specs=pl.BlockSpec((None, None, S, hd), lambda b, h, t: (b, h, 0, 0)),
            scratch_shapes=[
                pltpu.VMEM((S, 1), jnp.float32),     # running max
                pltpu.VMEM((S, 1), jnp.float32),     # running denom
                pltpu.VMEM((S, hd), jnp.float32),    # running weighted sum
            ],
        ),
        compiler_params=_compiler_params(("parallel", "parallel", "arbitrary")),
    )(q, k, v, mask)


# ----------------------------------------------------------------------------
# Fused RMSNorm + SwiGLU FFN + residual:  out = x + w2( silu(xn @ w1) * (xn @ w3) )
# ----------------------------------------------------------------------------

def _ffn_kernel(x_ref, nw_ref, w13_ref, w2_ref, o_ref, xn_ref, acc_ref, *, tile_h, eps):
    k = pl.program_id(1)

    @pl.when(k == 0)
    def _():
        xf = x_ref[...].astype(jnp.float32)
        var = jnp.mean(xf * xf, axis=-1, keepdims=True)
        xn = xf * jax.lax.rsqrt(var + eps) * nw_ref[...].astype(jnp.float32)
        xn_ref[...] = xn.astype(xn_ref.dtype)          # computed once per M tile
        acc_ref[...] = jnp.zeros_like(acc_ref)

    # one fused gate matmul: [h1 | h3] = xn @ [w1_tile | w3_tile]   (tm, 2*tile_h)
    h = jnp.dot(xn_ref[...], w13_ref[...], preferred_element_type=jnp.float32)
    h1 = h[:, :tile_h]
    h3 = h[:, tile_h:]
    gated = (h1 * jax.nn.sigmoid(h1)) * h3
    acc_ref[...] += jnp.dot(gated.astype(w2_ref.dtype), w2_ref[...],
                            preferred_element_type=jnp.float32)

    @pl.when(k == pl.num_programs(1) - 1)
    def _():
        # fused residual add in the epilogue
        o_ref[...] = (x_ref[...].astype(jnp.float32) + acc_ref[...]).astype(o_ref.dtype)


def feed_forward(x2d, norm_w, w13, w2, *, tile_h, eps, out_dtype=None):
    """x2d: (M, D); w13: (D, 2H) interleaved per hidden tile; w2: (H, D)."""
    M, D = x2d.shape
    H = w13.shape[1] // 2
    assert H % tile_h == 0
    n_h = H // tile_h
    out_dtype = out_dtype or x2d.dtype

    _, budget = _vmem_budget()
    isz = jnp.dtype(w13.dtype).itemsize
    xsz = jnp.dtype(x2d.dtype).itemsize
    tm = _largest_tile(M, 8, 256)
    if M >= 16 and M // tm < 2:                       # megacore: >= 2 parallel steps
        tm = _largest_tile(M, 8, max(8, M // 2))

    def fp(tm_):
        w = 2 * (D * 2 * tile_h + tile_h * D) * isz   # double-buffered weight tiles
        act = 2 * tm_ * D * xsz + 2 * tm_ * D * 4     # x tile + out tile
        scr = tm_ * D * (isz + 4)                     # xn + acc scratch
        return w + act + scr

    while tm > 8 and fp(tm) > budget and (tm // 2) % 8 == 0 and M % (tm // 2) == 0:
        tm //= 2

    return pl.pallas_call(
        functools.partial(_ffn_kernel, tile_h=tile_h, eps=eps),
        out_shape=jax.ShapeDtypeStruct((M, D), out_dtype),
        grid_spec=pltpu.PrefetchScalarGridSpec(
            num_scalar_prefetch=0,
            grid=(M // tm, n_h),                                    # reduction axis last
            in_specs=[
                pl.BlockSpec((tm, D), lambda i, k: (i, 0)),         # x (also the residual)
                pl.BlockSpec((1, D), lambda i, k: (0, 0)),          # ffn_norm weight
                pl.BlockSpec((D, 2 * tile_h), lambda i, k: (0, k)),  # [w1|w3] tile
                pl.BlockSpec((tile_h, D), lambda i, k: (k, 0)),     # w2 tile
            ],
            out_specs=pl.BlockSpec((tm, D), lambda i, k: (i, 0)),   # resident across k
            scratch_shapes=[
                pltpu.VMEM((tm, D), w13.dtype),     # normalized x (once per M tile)
                pltpu.VMEM((tm, D), jnp.float32),   # f32 accumulator
            ],
        ),
        compiler_params=_compiler_params(("parallel", "arbitrary")),
    )(x2d, norm_w.reshape(1, D), w13, w2)


# ----------------------------------------------------------------------------
# Plain-JAX glue: rotary embedding, frequency table
# ----------------------------------------------------------------------------

def precompute_freqs(head_dim, seq_len, start_pos, theta=10000.0):
    freqs = 1.0 / (theta ** (jnp.arange(0, head_dim, 2, dtype=jnp.float32) / head_dim))
    t = jnp.arange(start_pos, start_pos + seq_len, dtype=jnp.float32)
    angles = jnp.outer(t, freqs)                     # (S, head_dim // 2)
    return jnp.cos(angles), jnp.sin(angles)


def apply_rotary_emb(xq, xk, cos, sin, *, transpose_heads=False):
    """Matches torch view_as_complex pairing of consecutive elements.
    With transpose_heads=True the outputs come back head-major (B, heads, S, hd),
    fusing the layout change into the rotary elementwise pass."""
    def rot(x):
        xf = x.astype(jnp.float32)
        xr = xf.reshape(*xf.shape[:-1], -1, 2)
        xe, xo = xr[..., 0], xr[..., 1]
        c = cos[None, :, None, :]
        s = sin[None, :, None, :]
        out = jnp.stack([xe * c - xo * s, xe * s + xo * c], axis=-1)
        out = out.reshape(x.shape).astype(x.dtype)
        return jnp.transpose(out, (0, 2, 1, 3)) if transpose_heads else out
    return rot(xq), rot(xk)


# ----------------------------------------------------------------------------
# TransformerBlock forward (Pallas path)
# ----------------------------------------------------------------------------

def transformer_block_forward(x, params, cache_k, cache_v, start_pos, cos, sin, mask, cfg):
    """cache_k / cache_v are stored head-major (B, n_kv_heads, max_seq_len, head_dim)
    so the (large) cached K/V never needs a per-step transpose or GQA repeat."""
    B, S, D = x.shape
    H = cfg["n_heads"]
    Kv = cfg["n_kv_heads"]
    hd = D // H
    n_rep = H // Kv
    eps = cfg["norm_eps"]
    M = B * S
    x2d = x.reshape(M, D)
    approx_recip = params["wqkv"].dtype != jnp.float32

    # -------- attention_norm fused into a single QKV projection matmul --------
    qkv = fused_norm_linear(x2d, params["attention_norm"], params["wqkv"],
                            eps=eps, out_dtype=x.dtype)
    q_dim, kv_dim = H * hd, Kv * hd
    xq = qkv[:, :q_dim].reshape(B, S, H, hd)
    xk = qkv[:, q_dim:q_dim + kv_dim].reshape(B, S, Kv, hd)
    xv = qkv[:, q_dim + kv_dim:].reshape(B, S, Kv, hd)
    xq, xk = apply_rotary_emb(xq, xk, cos, sin, transpose_heads=True)   # head-major
    xv = jnp.transpose(xv, (0, 2, 1, 3))

    # functional KV-cache update (equivalent of the in-place torch cache write)
    cache_k = jax.lax.dynamic_update_slice(cache_k, xk.astype(cache_k.dtype),
                                           (0, 0, start_pos, 0))
    cache_v = jax.lax.dynamic_update_slice(cache_v, xv.astype(cache_v.dtype),
                                           (0, 0, start_pos, 0))
    keys = cache_k[:B, :, :start_pos + S]
    values = cache_v[:B, :, :start_pos + S]

    attn = attention_core(xq, keys, values, mask, scale=1.0 / math.sqrt(hd),
                          n_rep=n_rep, approx_recip=approx_recip)       # (B, H, S, hd)
    attn2d = jnp.transpose(attn, (0, 2, 1, 3)).reshape(M, H * hd)
    # TODO(synk): store attention output straight into (B, S, D) to drop this transpose
    # (needs a squeezed middle-dim out BlockSpec, which the (8,128) rule disallows here).

    # -------- wo projection with the residual add fused into the epilogue --------
    h2d = linear(attn2d, params["wo"], residual=x2d, out_dtype=x.dtype)

    # -------- ffn_norm + SwiGLU FFN + residual, all in one kernel --------
    out2d = feed_forward(h2d, params["ffn_norm"], params["w13"], params["w2"],
                         tile_h=params["ffn_tile_h"], eps=eps, out_dtype=x.dtype)
    return out2d.reshape(B, S, D), cache_k, cache_v


# ----------------------------------------------------------------------------
# Pure-JAX reference (mirrors the PyTorch module exactly, original cache layout)
# ----------------------------------------------------------------------------

def reference_block_forward(x, raw, cache_k, cache_v, start_pos, cos, sin, mask, cfg):
    B, S, D = x.shape
    H = cfg["n_heads"]
    Kv = cfg["n_kv_heads"]
    hd = D // H
    n_rep = H // Kv
    eps = cfg["norm_eps"]
    hp = jax.lax.Precision.HIGHEST

    def rms(v, w):
        vf = v.astype(jnp.float32)
        var = jnp.mean(vf * vf, axis=-1, keepdims=True)
        return (vf * jax.lax.rsqrt(var + eps) * w).astype(w.dtype)

    xn = rms(x, raw["attention_norm"])
    xq = jnp.dot(xn, raw["wq"], precision=hp).reshape(B, S, H, hd)
    xk = jnp.dot(xn, raw["wk"], precision=hp).reshape(B, S, Kv, hd)
    xv = jnp.dot(xn, raw["wv"], precision=hp).reshape(B, S, Kv, hd)
    xq, xk = apply_rotary_emb(xq, xk, cos, sin)
    cache_k = jax.lax.dynamic_update_slice(cache_k, xk.astype(cache_k.dtype),
                                           (0, start_pos, 0, 0))
    cache_v = jax.lax.dynamic_update_slice(cache_v, xv.astype(cache_v.dtype),
                                           (0, start_pos, 0, 0))
    keys = cache_k[:B, :start_pos + S]
    values = cache_v[:B, :start_pos + S]
    if n_rep > 1:
        keys = jnp.repeat(keys, n_rep, axis=2)
        values = jnp.repeat(values, n_rep, axis=2)
    qh = jnp.transpose(xq, (0, 2, 1, 3))
    kh = jnp.transpose(keys, (0, 2, 1, 3))
    vh = jnp.transpose(values, (0, 2, 1, 3))
    scores = jnp.einsum("bhsd,bhtd->bhst", qh, kh, precision=hp) / math.sqrt(hd)
    scores = scores + mask[None, None]
    probs = jax.nn.softmax(scores.astype(jnp.float32), axis=-1).astype(qh.dtype)
    out = jnp.einsum("bhst,bhtd->bhsd", probs, vh, precision=hp)
    out = jnp.transpose(out, (0, 2, 1, 3)).reshape(B, S, H * hd)
    h = x + jnp.dot(out, raw["wo"], precision=hp)
    hn = rms(h, raw["ffn_norm"])
    h1 = jnp.dot(hn, raw["w1"], precision=hp)
    h3 = jnp.dot(hn, raw["w3"], precision=hp)
    ffn = jnp.dot(jax.nn.silu(h1) * h3, raw["w2"], precision=hp)
    return h + ffn


# ----------------------------------------------------------------------------
# Driver
# ----------------------------------------------------------------------------

if __name__ == "__main__":
    dim = 256
    n_heads = 4
    n_kv_heads = 2                    # GQA: n_rep = 2 exercises the h -> h//n_rep mapping
    head_dim = dim // n_heads         # 64
    multiple_of = 256
    hidden_dim_raw = 500
    hidden_dim = multiple_of * ((hidden_dim_raw + multiple_of - 1) // multiple_of)  # 512
    max_seq_len = 16
    norm_eps = 1e-5

    batch, seq, start_pos = 2, 8, 0

    key = jax.random.PRNGKey(0)
    ks = jax.random.split(key, 9)

    def init_linear(k, fan_in, fan_out):
        bound = 1.0 / math.sqrt(fan_in)
        # stored as (in_features, out_features) == transpose of nn.Linear weight
        return jax.random.uniform(k, (fan_in, fan_out), minval=-bound, maxval=bound,
                                  dtype=jnp.float32)

    raw_params = {
        "attention_norm": jnp.ones((dim,), jnp.float32),
        "ffn_norm": jnp.ones((dim,), jnp.float32),
        "wq": init_linear(ks[0], dim, n_heads * head_dim),
        "wk": init_linear(ks[1], dim, n_kv_heads * head_dim),
        "wv": init_linear(ks[2], dim, n_kv_heads * head_dim),
        "wo": init_linear(ks[3], n_heads * head_dim, dim),
        "w1": init_linear(ks[4], dim, hidden_dim),
        "w3": init_linear(ks[5], dim, hidden_dim),
        "w2": init_linear(ks[6], hidden_dim, dim),
    }

    x = jax.random.normal(ks[7], (batch, seq, dim), dtype=jnp.float32)

    # Pallas path stores the KV cache head-major; reference keeps the torch layout.
    cache_k = jnp.zeros((batch, n_kv_heads, max_seq_len, head_dim), jnp.float32)
    cache_v = jnp.zeros((batch, n_kv_heads, max_seq_len, head_dim), jnp.float32)
    ref_cache_k = jnp.zeros((batch, max_seq_len, n_kv_heads, head_dim), jnp.float32)
    ref_cache_v = jnp.zeros((batch, max_seq_len, n_kv_heads, head_dim), jnp.float32)

    cos, sin = precompute_freqs(head_dim, seq, start_pos)

    # Causal mask (large-negative instead of -inf, same as the Llama driver).
    neg = jnp.float32(-1e30)
    mask = jnp.triu(jnp.full((seq, seq), neg, dtype=jnp.float32), k=1)
    mask = jnp.concatenate([jnp.zeros((seq, start_pos), jnp.float32), mask], axis=1)

    cfg = {"n_heads": n_heads, "n_kv_heads": n_kv_heads, "norm_eps": norm_eps}

    out_ref = reference_block_forward(
        x, raw_params, ref_cache_k, ref_cache_v, start_pos, cos, sin, mask, cfg)
    out_ref = jax.block_until_ready(out_ref)

    # ---- f32 compute path (matches the module's numerics; strict check) ----
    params_f32 = prepare_params(raw_params, compute_dtype=jnp.float32)
    out_f32, _, _ = transformer_block_forward(
        x, params_f32, cache_k, cache_v, start_pos, cos, sin, mask, cfg)
    out_f32 = jax.block_until_ready(out_f32)
    assert out_f32.shape == (batch, seq, dim)
    err_f32 = float(jnp.max(jnp.abs(out_f32 - out_ref)))
    assert jnp.allclose(out_f32, out_ref, atol=5e-3, rtol=5e-3), f"f32 mismatch: {err_f32}"

    # ---- bf16 compute path (weights cast once at load; f32 MXU accumulation) ----
    params_bf16 = prepare_params(raw_params, compute_dtype=jnp.bfloat16)
    out_bf16, _, _ = transformer_block_forward(
        x, params_bf16, cache_k, cache_v, start_pos, cos, sin, mask, cfg)
    out_bf16 = jax.block_until_ready(out_bf16)
    err_bf16 = float(jnp.max(jnp.abs(out_bf16 - out_ref)))
    assert jnp.allclose(out_bf16, out_ref, atol=1e-1, rtol=1e-1), f"bf16 mismatch: {err_bf16}"

    print("KERNEL_OK")
</pallas_src>

<mosaic_0001>
module attributes {stable_mosaic.version = 11 : i64} {
  func.func @_norm_linear_kernel(%arg0: i32, %arg1: i32, %arg2: memref<8x256xf32, #tpu.memory_space<vmem>>, %arg3: memref<1x256xf32, #tpu.memory_space<vmem>>, %arg4: memref<256x512xf32, #tpu.memory_space<vmem>>, %arg5: memref<8x512xf32, #tpu.memory_space<vmem>>) attributes {dimension_semantics = [#tpu.dimension_semantics<parallel>, #tpu.dimension_semantics<parallel>], iteration_bounds = array<i64: 2, 1>, scalar_prefetch = 0 : i64, scratch_operands = 0 : i64, tpu.core_type = #tpu.core_type<tc>, window_params = [{transform_indices = @transform_0, window_bounds = array<i64: 8, 256>}, {pipeline_mode = #tpu.pipeline_mode<synchronous>, transform_indices = @transform_1, window_bounds = array<i64: 1, 256>}, {transform_indices = @transform_2, window_bounds = array<i64: 256, 512>}, {transform_indices = @transform_3, window_bounds = array<i64: 8, 512>}]} {
    %c0 = arith.constant 0 : index
    %c0_0 = arith.constant 0 : index
    %0 = vector.load %arg2[%c0, %c0_0] : memref<8x256xf32, #tpu.memory_space<vmem>>, vector<8x256xf32>
    %1 = arith.mulf %0, %0 : vector<8x256xf32>
    %cst = arith.constant dense<0.000000e+00> : vector<8xf32>
    %2 = vector.multi_reduction <add>, %1, %cst [1] : vector<8x256xf32> to vector<8xf32>
    %3 = vector.shape_cast %2 : vector<8xf32> to vector<8x1xf32>
    %cst_1 = arith.constant 2.560000e+02 : f32
    %4 = vector.broadcast %cst_1 : f32 to vector<8x1xf32>
    %5 = arith.divf %3, %4 : vector<8x1xf32>
    %cst_2 = arith.constant 9.99999974E-6 : f32
    %6 = vector.broadcast %cst_2 : f32 to vector<8x1xf32>
    %7 = arith.addf %5, %6 : vector<8x1xf32>
    %8 = math.rsqrt %7 : vector<8x1xf32>
    %9 = vector.broadcast %8 : vector<8x1xf32> to vector<8x256xf32>
    %10 = arith.mulf %0, %9 : vector<8x256xf32>
    %c0_3 = arith.constant 0 : index
    %c0_4 = arith.constant 0 : index
    %11 = vector.load %arg3[%c0_3, %c0_4] : memref<1x256xf32, #tpu.memory_space<vmem>>, vector<1x256xf32>
    %12 = vector.broadcast %11 : vector<1x256xf32> to vector<8x256xf32>
    %13 = arith.mulf %10, %12 : vector<8x256xf32>
    %c0_5 = arith.constant 0 : index
    %c0_6 = arith.constant 0 : index
    %14 = vector.load %arg4[%c0_5, %c0_6] : memref<256x512xf32, #tpu.memory_space<vmem>>, vector<256x512xf32>
    %cst_7 = arith.constant dense<0.000000e+00> : vector<8x512xf32>
    %15 = tpu.matmul %13, %14, %cst_7 {dimension_numbers = #tpu.dot_dimension_numbers<[1], [0], [0], [1], [0, 0, 1, 1], [], []>} : vector<8x256xf32>, vector<256x512xf32>, vector<8x512xf32> -> vector<8x512xf32>
    %c0_8 = arith.constant 0 : index
    %c0_9 = arith.constant 0 : index
    %16 = vector.load %arg5[%c0_8, %c0_9] : memref<8x512xf32, #tpu.memory_space<vmem>>, vector<8x512xf32>
    tpu.vector_store %arg5[%c0_8, %c0_9], %15 {strides = array<i32>} : memref<8x512xf32, #tpu.memory_space<vmem>>, vector<8x512xf32>,
    return
  }
  func.func @transform_0(%arg0: i32, %arg1: i32) -> (i32, i32) {
    %c0_i32 = arith.constant 0 : i32
    %c0_i32_0 = arith.constant 0 : i32
    return %arg0, %c0_i32 : i32, i32
  }
  func.func @transform_1(%arg0: i32, %arg1: i32) -> (i32, i32) {
    %c0_i32 = arith.constant 0 : i32
    %c0_i32_0 = arith.constant 0 : i32
    %c0_i32_1 = arith.constant 0 : i32
    return %c0_i32, %c0_i32_0 : i32, i32
  }
  func.func @transform_2(%arg0: i32, %arg1: i32) -> (i32, i32) {
    %c0_i32 = arith.constant 0 : i32
    %c0_i32_0 = arith.constant 0 : i32
    return %c0_i32, %arg1 : i32, i32
  }
  func.func @transform_3(%arg0: i32, %arg1: i32) -> (i32, i32) {
    %c0_i32 = arith.constant 0 : i32
    return %arg0, %arg1 : i32, i32
  }
}

</mosaic_0001>

<llo_original>
// kernel: tpu_custom_call.1
$region0: #{tpu_custom_call.1}
  #allocation0 [shape = 'u32[]', space=smem, size = 0x4, offset = 0x4, fixed_abs, tag = 'smem constant byte address 0x4 - core index']
  #allocation1 [shape = 'u32[144,128]{1,0:T(1,128)}', space=vmem, size = 0x12000, scoped, tag = 'internal scratch']
  %s0 = inlined_call_operand.hbm [shape: f32[16,256], index: 0, kind: input, shape index: {}]
  %s1 = inlined_call_operand.vmem [shape: f32[1,256], index: 1, kind: input, shape index: {}]
  %s2 = inlined_call_operand.hbm [shape: f32[256,512], index: 2, kind: input, shape index: {}]
  %s3 = inlined_call_operand.hbm [shape: f32[16,512], index: 3, kind: output, shape index: {}]
  %s4 = sld [smem:[#allocation0]]
  $region53: #{tpu_custom_call.1} parent=0
    _
  %s6 = ssub.s32 1, %s4
  %s7 = scalar_select 0, %s6, %s4
  $region1: #{tpu_custom_call.1} parent=0
    #allocation2 [shape = 'u8[16384]{0}', space=vmem, size = 0x4000, scoped, tag = 'input window, operand 0']
    #allocation3 [shape = 's32[2]{0}', space=sflag, size = 0x8, scoped, tag = 'scoped memory for tpu_custom_call.1']
    #allocation4 [shape = 's32[2]{0}', space=sflag, size = 0x8, scoped, tag = 'scoped memory for tpu_custom_call.1']
    #allocation5 [shape = 'u8[524288]{0}', space=vmem, size = 0x80000, scoped, tag = 'input window, operand 2, single buffered']
    #allocation6 [shape = 's32[1]{0}', space=sflag, size = 0x4, scoped, tag = 'scoped memory for tpu_custom_call.1']
    #allocation7 [shape = 'u8[32768]{0}', space=vmem, size = 0x8000, scoped, tag = 'output window, operand 0']
    %8 = vsyncpa [#allocation3], 0
    %s9 = scalar_lea.sflag [#allocation3], 1
    %10 = vsyncpa %s9, 0
    %11 = vsyncpa [#allocation6], 0
    %12 = vsyncpa [#allocation4], 0
    %s13 = scalar_lea.sflag [#allocation4], 1
    %14 = vsyncpa %s13, 0
    loop: start=0, step=1, limit=4
    $region2: #{tpu_custom_call.1} parent=1 // loop_pre_header
      _
    $region3: #{tpu_custom_call.1} parent=1 // loop_header
      %s16 = sphi 0, %s20
      %p17 = scmp.ge.s32.totalorder %s16, 4
      %s23 = sphi 0, %s35
      %s24 = sphi 0, %s31
      %s25 = sphi 0, %s23
      %s26 = sphi 0, %s24
      %s27 = sphi 0, %s25
      %s28 = sphi 0, %s26
      %s38 = sphi 0, %s40
      %s41 = sphi 0, %s38
      %s42 = sphi 0, %s41
      %s58 = sphi 0, %s42
      %s62 = sphi 0, %s62
      %s64 = sphi 0, %s62
      %s65 = sphi 0, %s64
      %s79 = sphi 0, %s65
      %s85 = sphi 0, %s87
      %s88 = sphi 0, %s85
      %s89 = sphi 0, %s88
      %s105 = sphi 0, %s89
      %s113 = sphi 0, %s115
      %s116 = sphi 0, %s113
      %s117 = sphi 0, %s116
      %s133 = sphi 0, %s117
    $region4: #{tpu_custom_call.1} parent=1 // loop_header_branch
      %19 = sbr.rel (%p17) target = $region8
    $region5: #{tpu_custom_call.1} parent=1 // loop_body
      %s21 = ssub.s32 %s16, 1
      %s22 = ssub.s32 %s16, 2
      %s29 = sadd.s32 1, %s24
      %p30 = scmp.ge.s32.totalorder %s29, 1
      %s31 = scalar_select %p30, 0, %s29
      %s32 = sadd.s32 1, %s23
      %s33 = scalar_select %p30, %s32, %s23
      %p34 = scmp.ge.s32.totalorder %s33, 2
      %s35 = scalar_select %p34, 0, %s33
      %s36 = ssub.s32 %s23, %s35
      %p37 = scmp.eq.s32.totalorder %s36, 0
      %s39 = sadd.s32 %s38, 1
      %s40 = scalar_select %p37, %s38, %s39
      %p43 = pneg %p37
      %p44 = scmp.eq.s32.totalorder %s16, 1
      %p45 = por %p43, %p44
      %p46 = scmp.ne.s32.totalorder %s38, %s41
      %p47 = scmp.eq.s32.totalorder %s16, 0
      %p48 = por %p46, %p47
      %p49 = scmp.ne.s32.totalorder %s38, %s41
      %p50 = scmp.eq.s32.totalorder %s21, 1
      %p51 = por %p49, %p50
      %p52 = scmp.ne.s32.totalorder %s41, %s42
      %p53 = scmp.eq.s32.totalorder %s21, 0
      %p54 = por %p52, %p53
      %p55 = scmp.ne.s32.totalorder %s41, %s42
      %p56 = scmp.eq.s32.totalorder %s22, 1
      %p57 = por %p55, %p56
      %p59 = scmp.ne.s32.totalorder %s42, %s58
      %p60 = scmp.eq.s32.totalorder %s22, 0
      %p61 = por %p59, %p60
      %s63 = sadd.s32 %s62, 1
      %p66 = scmp.eq.s32.totalorder %s16, 1
      %p67 = scmp.ne.s32.totalorder %s62, %s64
      %p68 = scmp.eq.s32.totalorder %s16, 0
      %p69 = por %p67, %p68
      %p70 = scmp.ne.s32.totalorder %s62, %s64
      %p71 = scmp.eq.s32.totalorder %s21, 1
      %p72 = por %p70, %p71
      %p73 = scmp.ne.s32.totalorder %s64, %s65
      %p74 = scmp.eq.s32.totalorder %s21, 0
      %p75 = por %p73, %p74
      %p76 = scmp.ne.s32.totalorder %s64, %s65
      %p77 = scmp.eq.s32.totalorder %s22, 1
      %p78 = por %p76, %p77
      %p80 = scmp.ne.s32.totalorder %s65, %s79
      %p81 = scmp.eq.s32.totalorder %s22, 0
      %p82 = por %p80, %p81
      %s83 = ssub.s32 %s24, %s31
      %p84 = scmp.eq.s32.totalorder %s83, 0
      %s86 = sadd.s32 %s85, 1
      %s87 = scalar_select %p84, %s85, %s86
      %p90 = pneg %p84
      %p91 = scmp.eq.s32.totalorder %s16, 1
      %p92 = por %p90, %p91
      %p93 = scmp.ne.s32.totalorder %s85, %s88
      %p94 = scmp.eq.s32.totalorder %s16, 0
      %p95 = por %p93, %p94
      %p96 = scmp.ne.s32.totalorder %s85, %s88
      %p97 = scmp.eq.s32.totalorder %s21, 1
      %p98 = por %p96, %p97
      %p99 = scmp.ne.s32.totalorder %s88, %s89
      %p100 = scmp.eq.s32.totalorder %s21, 0
      %p101 = por %p99, %p100
      %p102 = scmp.ne.s32.totalorder %s88, %s89
      %p103 = scmp.eq.s32.totalorder %s22, 1
      %p104 = por %p102, %p103
      %p106 = scmp.ne.s32.totalorder %s89, %s105
      %p107 = scmp.eq.s32.totalorder %s22, 0
      %p108 = por %p106, %p107
      %s109 = ssub.s32 %s23, %s35
      %s110 = ssub.s32 %s24, %s31
      %s111 = sor.u32 %s109, %s110
      %p112 = scmp.eq.s32.totalorder %s111, 0
      %s114 = sadd.s32 %s113, 1
      %s115 = scalar_select %p112, %s113, %s114
      %p118 = pneg %p112
      %p119 = scmp.eq.s32.totalorder %s16, 1
      %p120 = por %p118, %p119
      %p121 = scmp.ne.s32.totalorder %s113, %s116
      %p122 = scmp.eq.s32.totalorder %s16, 0
      %p123 = por %p121, %p122
      %p124 = scmp.ne.s32.totalorder %s113, %s116
      %p125 = scmp.eq.s32.totalorder %s21, 1
      %p126 = por %p124, %p125
      %p127 = scmp.ne.s32.totalorder %s116, %s117
      %p128 = scmp.eq.s32.totalorder %s21, 0
      %p129 = por %p127, %p128
      %p130 = scmp.ne.s32.totalorder %s116, %s117
      %p131 = scmp.eq.s32.totalorder %s22, 1
      %p132 = por %p130, %p131
      %p134 = scmp.ne.s32.totalorder %s117, %s133
      %p135 = scmp.eq.s32.totalorder %s22, 0
      %p136 = por %p134, %p135
      %p137 = scmp.le.s32.totalorder 1, %s16
      %p138 = scmp.lt.s32.totalorder %s16, 3
      %p139 = pnand %p137, %p138
      %p140 = pneg %p139
      // Predicated region
      $region9: #{tpu_custom_call.1} parent=5 // pred_check
        _
      $region10: #{tpu_custom_call.1} parent=5 // pred_check_branch
        %142 = sbr.rel (%p139) target = $region12
      $region11: #{tpu_custom_call.1} parent=5 // pred_region
        %s143 = ssub.s32 %s16, 1
        // Predicated region
        $region13: #{tpu_custom_call.1} parent=11 // pred_check
          %p144 = pneg %p75
        $region14: #{tpu_custom_call.1} parent=11 // pred_check_branch
          %146 = sbr.rel (%p144) target = $region16
        $region15: #{tpu_custom_call.1} parent=11 // pred_region
          _
        $region16: #{tpu_custom_call.1} parent=11 // pred_fallthru
          _
        // Predicated region
        $region17: #{tpu_custom_call.1} parent=11 // pred_check
          %p147 = pneg %p101
        $region18: #{tpu_custom_call.1} parent=11 // pred_check_branch
          %149 = sbr.rel (%p147) target = $region20
        $region19: #{tpu_custom_call.1} parent=11 // pred_region
          %s150 = smul.u32 4, %s26
          %s152 = ssub.s32 16384, 16384
          %153 = vsyncadd [#allocation6], %s152
          %s154 = smul.addr %s150, 128
          %s155 = scalar_lea.hbm %s2, %s154
          %s156 = sshll.u32 [#allocation5], 4
          %s157 = int_to_ptr.vmem [resolvable:$true] %s156
          %162 = dma.hbm_to_vmem [thread:$0]  %s155, 16384, %s157, [#allocation6], 512, 512, 32
        $region20: #{tpu_custom_call.1} parent=11 // pred_fallthru
          _
      $region12: #{tpu_custom_call.1} parent=5 // pred_fallthru
        _
      %p163 = scmp.lt.s32.totalorder %s16, 2
      // Predicated region
      $region21: #{tpu_custom_call.1} parent=5 // pred_check
        %p164 = pneg %p163
      $region22: #{tpu_custom_call.1} parent=5 // pred_check_branch
        %166 = sbr.rel (%p164) target = $region24
      $region23: #{tpu_custom_call.1} parent=5 // pred_region
        // Predicated region
        $region25: #{tpu_custom_call.1} parent=23 // pred_check
          %p167 = pneg %p48
        $region26: #{tpu_custom_call.1} parent=23 // pred_check_branch
          %169 = sbr.rel (%p167) target = $region28
        $region27: #{tpu_custom_call.1} parent=23 // pred_region
          %s170 = sand.u32 %s38, 1
          %s171 = scalar_lea.sflag [#allocation3], %s170
          %s172 = sand.u32 %s38, 1
          %s173 = smul.addr %s172, 16
          %s174 = scalar_lea.vmem [#allocation2], %s173
          %s176 = ssub.s32 256, 256
          %177 = vsyncadd %s171, %s176
          %s178 = smul.addr %s23, 2
          %s179 = smul.addr %s178, 128
          %s180 = scalar_lea.hbm %s0, %s179
          %s182 = sshll.u32 %s174, 4
          %s183 = int_to_ptr.vmem [resolvable:$true] %s182
          %185 = dma.hbm_to_vmem [thread:$0]  %s180, 256, %s183, %s171
        $region28: #{tpu_custom_call.1} parent=23 // pred_fallthru
          _
      $region24: #{tpu_custom_call.1} parent=5 // pred_fallthru
        _
      %p186 = scmp.le.s32.totalorder 1, %s16
      %p187 = scmp.lt.s32.totalorder %s16, 3
      %p188 = pnand %p186, %p187
      %p189 = pneg %p188
      // Predicated region
      $region29: #{tpu_custom_call.1} parent=5 // pred_check
        _
      $region30: #{tpu_custom_call.1} parent=5 // pred_check_branch
        %191 = sbr.rel (%p188) target = $region32
      $region31: #{tpu_custom_call.1} parent=5 // pred_region
        %s192 = ssub.s32 %s16, 1
        %s193 = sand.u32 %s41, 1
        %s194 = scalar_lea.sflag [#allocation3], %s193
        %s195 = sand.u32 %s41, 1
        %s196 = smul.addr %s195, 16
        %s197 = scalar_lea.vmem [#allocation2], %s196
        // Predicated region
        $region33: #{tpu_custom_call.1} parent=31 // pred_check
          %p198 = pneg %p54
        $region34: #{tpu_custom_call.1} parent=31 // pred_check_branch
          %200 = sbr.rel (%p198) target = $region36
        $region35: #{tpu_custom_call.1} parent=31 // pred_region
          %201 = dma.done %s194, 256
        $region36: #{tpu_custom_call.1} parent=31 // pred_fallthru
          _
        // Predicated region
        $region37: #{tpu_custom_call.1} parent=31 // pred_check
          %p202 = pneg %p101
        $region38: #{tpu_custom_call.1} parent=31 // pred_check_branch
          %204 = sbr.rel (%p202) target = $region40
        $region39: #{tpu_custom_call.1} parent=31 // pred_region
          %205 = dma.done [#allocation6], 16384
        $region40: #{tpu_custom_call.1} parent=31 // pred_fallthru
          _
        %s206 = sand.u32 %s41, 1
        %s207 = scalar_lea.sflag [#allocation3], %s206
        %s208 = sand.u32 %s41, 1
        %s209 = smul.addr %s208, 16
        %s210 = scalar_lea.vmem [#allocation2], %s209
        %p211 = pneg %p54
        %p212 = pneg %p51
        %p213 = pneg %p75
        %p214 = pneg %p72
        %p215 = pneg %p101
        %p216 = pneg %p98
        %p217 = pneg %p129
        %p218 = pneg %p126
        %s219 = sand.u32 %s116, 1
        %s220 = scalar_lea.sflag [#allocation4], %s219
        %s221 = sand.u32 %s116, 1
        %s222 = smul.addr %s221, 32
        %s223 = scalar_lea.vmem [#allocation7], %s222
        %s224 = smul.u32 4, %s26
        %s225 = smul.u32 4, %s26
        %v226 = vld [vmem:[%s197] sm:$0xff]
        %v227 = vld [vmem:[%s197 + $0x8] sm:$0xff]
        %v228 = vmul.f32 %v226, %v226
        %v229 = vmul.f32 %v227, %v227
        %v230 = vadd.f32 %v228, %v229
        %231 = vadd.xlane.f32.xlu0 %v230
        %v232 = vpop.xlane.xlu0 %231
        %v233 = vrcp.pop 256.0
        %v234 = vmul.f32 %v232, %v233
        %v235 = vadd.f32 %v234, 1e-05
        %v236 = vrsqrt.pop %v235
        %v237 = vmul.f32 %v226, %v236
        %v238 = vmul.f32 %v227, %v236
        %v239 = vld [vmem:[%s1] sm:$0x3]
        %v241 = vlaneseq
        %v242 = vshrl.u32 %v241, 7
        %v243 = vsub.s32 0, %v242
        %v244 = vrot.slane %v239, %v243
        %v245 = vlaneseq
        %v246 = vshrl.u32 %v245, 7
        %v247 = vsub.s32 1, %v246
        %v248 = vrot.slane %v239, %v247
        %v251 = vmul.f32 %v237, %v244
        %v252 = vmul.f32 %v238, %v248
        %v253 = vld [vmem:[#allocation5] sm:$0xff]
        %v254 = vld [vmem:[#allocation5 + $0x8] sm:$0xff]
        %v255 = vld [vmem:[#allocation5 + $0x10] sm:$0xff]
        %v256 = vld [vmem:[#allocation5 + $0x18] sm:$0xff]
        %v257 = vld [vmem:[#allocation5 + $0x20] sm:$0xff]
        %v258 = vld [vmem:[#allocation5 + $0x28] sm:$0xff]
        %v259 = vld [vmem:[#allocation5 + $0x30] sm:$0xff]
        %v260 = vld [vmem:[#allocation5 + $0x38] sm:$0xff]
        %v261 = vld [vmem:[#allocation5 + $0x40] sm:$0xff]
        %v262 = vld [vmem:[#allocation5 + $0x48] sm:$0xff]
        %v263 = vld [vmem:[#allocation5 + $0x50] sm:$0xff]
        %v264 = vld [vmem:[#allocation5 + $0x58] sm:$0xff]
        %v265 = vld [vmem:[#allocation5 + $0x60] sm:$0xff]
        %v266 = vld [vmem:[#allocation5 + $0x68] sm:$0xff]
        %v267 = vld [vmem:[#allocation5 + $0x70] sm:$0xff]
        %v268 = vld [vmem:[#allocation5 + $0x78] sm:$0xff]
        %v269 = vld [vmem:[#allocation5 + $0x80] sm:$0xff]
        %v270 = vld [vmem:[#allocation5 + $0x88] sm:$0xff]
        %v271 = vld [vmem:[#allocation5 + $0x90] sm:$0xff]
        %v272 = vld [vmem:[#allocation5 + $0x98] sm:$0xff]
        %v273 = vld [vmem:[#allocation5 + $0xa0] sm:$0xff]
        %v274 = vld [vmem:[#allocation5 + $0xa8] sm:$0xff]
        %v275 = vld [vmem:[#allocation5 + $0xb0] sm:$0xff]
        %v276 = vld [vmem:[#allocation5 + $0xb8] sm:$0xff]
        %v277 = vld [vmem:[#allocation5 + $0xc0] sm:$0xff]
        %v278 = vld [vmem:[#allocation5 + $0xc8] sm:$0xff]
        %v279 = vld [vmem:[#allocation5 + $0xd0] sm:$0xff]
        %v280 = vld [vmem:[#allocation5 + $0xd8] sm:$0xff]
        %v281 = vld [vmem:[#allocation5 + $0xe0] sm:$0xff]
        %v282 = vld [vmem:[#allocation5 + $0xe8] sm:$0xff]
        %v283 = vld [vmem:[#allocation5 + $0xf0] sm:$0xff]
        %v284 = vld [vmem:[#allocation5 + $0xf8] sm:$0xff]
        %v285 = vld [vmem:[#allocation5 + $0x100] sm:$0xff]
        %v286 = vld [vmem:[#allocation5 + $0x108] sm:$0xff]
        %v287 = vld [vmem:[#allocation5 + $0x110] sm:$0xff]
        %v288 = vld [vmem:[#allocation5 + $0x118] sm:$0xff]
        %v289 = vld [vmem:[#allocation5 + $0x120] sm:$0xff]
        %v290 = vld [vmem:[#allocation5 + $0x128] sm:$0xff]
        %v291 = vld [vmem:[#allocation5 + $0x130] sm:$0xff]
        %v292 = vld [vmem:[#allocation5 + $0x138] sm:$0xff]
        %v293 = vld [vmem:[#allocation5 + $0x140] sm:$0xff]
        %v294 = vld [vmem:[#allocation5 + $0x148] sm:$0xff]
        %v295 = vld [vmem:[#allocation5 + $0x150] sm:$0xff]
        %v296 = vld [vmem:[#allocation5 + $0x158] sm:$0xff]
        %v297 = vld [vmem:[#allocation5 + $0x160] sm:$0xff]
        %v298 = vld [vmem:[#allocation5 + $0x168] sm:$0xff]
        %v299 = vld [vmem:[#allocation5 + $0x170] sm:$0xff]
        %v300 = vld [vmem:[#allocation5 + $0x178] sm:$0xff]
        %v301 = vld [vmem:[#allocation5 + $0x180] sm:$0xff]
        %v302 = vld [vmem:[#allocation5 + $0x188] sm:$0xff]
        %v303 = vld [vmem:[#allocation5 + $0x190] sm:$0xff]
        %v304 = vld [vmem:[#allocation5 + $0x198] sm:$0xff]
        %v305 = vld [vmem:[#allocation5 + $0x1a0] sm:$0xff]
        %v306 = vld [vmem:[#allocation5 + $0x1a8] sm:$0xff]
        %v307 = vld [vmem:[#allocation5 + $0x1b0] sm:$0xff]
        %v308 = vld [vmem:[#allocation5 + $0x1b8] sm:$0xff]
        %v309 = vld [vmem:[#allocation5 + $0x1c0] sm:$0xff]
        %v310 = vld [vmem:[#allocation5 + $0x1c8] sm:$0xff]
        %v311 = vld [vmem:[#allocation5 + $0x1d0] sm:$0xff]
        %v312 = vld [vmem:[#allocation5 + $0x1d8] sm:$0xff]
        %v313 = vld [vmem:[#allocation5 + $0x1e0] sm:$0xff]
        %v314 = vld [vmem:[#allocation5 + $0x1e8] sm:$0xff]
        %v315 = vld [vmem:[#allocation5 + $0x1f0] sm:$0xff]
        %v316 = vld [vmem:[#allocation5 + $0x1f8] sm:$0xff]
        %v317 = vld [vmem:[#allocation5 + $0x200] sm:$0xff]
        %v318 = vld [vmem:[#allocation5 + $0x208] sm:$0xff]
        %v319 = vld [vmem:[#allocation5 + $0x210] sm:$0xff]
        %v320 = vld [vmem:[#allocation5 + $0x218] sm:$0xff]
        %v321 = vld [vmem:[#allocation5 + $0x220] sm:$0xff]
        %v322 = vld [vmem:[#allocation5 + $0x228] sm:$0xff]
        %v323 = vld [vmem:[#allocation5 + $0x230] sm:$0xff]
        %v324 = vld [vmem:[#allocation5 + $0x238] sm:$0xff]
        %v325 = vld [vmem:[#allocation5 + $0x240] sm:$0xff]
        %v326 = vld [vmem:[#allocation5 + $0x248] sm:$0xff]
        %v327 = vld [vmem:[#allocation5 + $0x250] sm:$0xff]
        %v328 = vld [vmem:[#allocation5 + $0x258] sm:$0xff]
        %v329 = vld [vmem:[#allocation5 + $0x260] sm:$0xff]
        %v330 = vld [vmem:[#allocation5 + $0x268] sm:$0xff]
        %v331 = vld [vmem:[#allocation5 + $0x270] sm:$0xff]
        %v332 = vld [vmem:[#allocation5 + $0x278] sm:$0xff]
        %v333 = vld [vmem:[#allocation5 + $0x280] sm:$0xff]
        %v334 = vld [vmem:[#allocation5 + $0x288] sm:$0xff]
        %v335 = vld [vmem:[#allocation5 + $0x290] sm:$0xff]
        %v336 = vld [vmem:[#allocation5 + $0x298] sm:$0xff]
        %v337 = vld [vmem:[#allocation5 + $0x2a0] sm:$0xff]
        %v338 = vld [vmem:[#allocation5 + $0x2a8] sm:$0xff]
        %v339 = vld [vmem:[#allocation5 + $0x2b0] sm:$0xff]
        %v340 = vld [vmem:[#allocation5 + $0x2b8] sm:$0xff]
        %v341 = vld [vmem:[#allocation5 + $0x2c0] sm:$0xff]
        %v342 = vld [vmem:[#allocation5 + $0x2c8] sm:$0xff]
        %v343 = vld [vmem:[#allocation5 + $0x2d0] sm:$0xff]
        %v344 = vld [vmem:[#allocation5 + $0x2d8] sm:$0xff]
        %v345 = vld [vmem:[#allocation5 + $0x2e0] sm:$0xff]
        %v346 = vld [vmem:[#allocation5 + $0x2e8] sm:$0xff]
        %v347 = vld [vmem:[#allocation5 + $0x2f0] sm:$0xff]
        %v348 = vld [vmem:[#allocation5 + $0x2f8] sm:$0xff]
        %v349 = vld [vmem:[#allocation5 + $0x300] sm:$0xff]
        %v350 = vld [vmem:[#allocation5 + $0x308] sm:$0xff]
        %v351 = vld [vmem:[#allocation5 + $0x310] sm:$0xff]
        %v352 = vld [vmem:[#allocation5 + $0x318] sm:$0xff]
        %v353 = vld [vmem:[#allocation5 + $0x320] sm:$0xff]
        %v354 = vld [vmem:[#allocation5 + $0x328] sm:$0xff]
        %v355 = vld [vmem:[#allocation5 + $0x330] sm:$0xff]
        %v356 = vld [vmem:[#allocation5 + $0x338] sm:$0xff]
        %v357 = vld [vmem:[#allocation5 + $0x340] sm:$0xff]
        %v358 = vld [vmem:[#allocation5 + $0x348] sm:$0xff]
        %v359 = vld [vmem:[#allocation5 + $0x350] sm:$0xff]
        %v360 = vld [vmem:[#allocation5 + $0x358] sm:$0xff]
        %v361 = vld [vmem:[#allocation5 + $0x360] sm:$0xff]
        %v362 = vld [vmem:[#allocation5 + $0x368] sm:$0xff]
        %v363 = vld [vmem:[#allocation5 + $0x370] sm:$0xff]
        %v364 = vld [vmem:[#allocation5 + $0x378] sm:$0xff]
        %v365 = vld [vmem:[#allocation5 + $0x380] sm:$0xff]
        %v366 = vld [vmem:[#allocation5 + $0x388] sm:$0xff]
        %v367 = vld [vmem:[#allocation5 + $0x390] sm:$0xff]
        %v368 = vld [vmem:[#allocation5 + $0x398] sm:$0xff]
        %v369 = vld [vmem:[#allocation5 + $0x3a0] sm:$0xff]
        %v370 = vld [vmem:[#allocation5 + $0x3a8] sm:$0xff]
        %v371 = vld [vmem:[#allocation5 + $0x3b0] sm:$0xff]
        %v372 = vld [vmem:[#allocation5 + $0x3b8] sm:$0xff]
        %v373 = vld [vmem:[#allocation5 + $0x3c0] sm:$0xff]
        %v374 = vld [vmem:[#allocation5 + $0x3c8] sm:$0xff]
        %v375 = vld [vmem:[#allocation5 + $0x3d0] sm:$0xff]
        %v376 = vld [vmem:[#allocation5 + $0x3d8] sm:$0xff]
        %v377 = vld [vmem:[#allocation5 + $0x3e0] sm:$0xff]
        %v378 = vld [vmem:[#allocation5 + $0x3e8] sm:$0xff]
        %v379 = vld [vmem:[#allocation5 + $0x3f0] sm:$0xff]
        %v380 = vld [vmem:[#allocation5 + $0x3f8] sm:$0xff]
        %381 = vmatprep.subr.mxu0 %v254
        %382 = vmatpush1.msra.mxu0 %v253
        %383 = vmatprep.subr.mxu0 %v258
        %384 = vmatpush1.msra.mxu0 %v257
        %385 = vmatprep.subr.mxu0 %v262
        %386 = vmatpush1.msra.mxu0 %v261
        %387 = vmatprep.subr.mxu0 %v266
        %388 = vmatpush1.msra.mxu0 %v265
        %389 = vmatprep.subr.mxu0 %v270
        %390 = vmatpush1.msra.mxu0 %v269
        %391 = vmatprep.subr.mxu0 %v274
        %392 = vmatpush1.msra.mxu0 %v273
        %393 = vmatprep.subr.mxu0 %v278
        %394 = vmatpush1.msra.mxu0 %v277
        %395 = vmatprep.subr.mxu0 %v282
        %396 = vmatpush1.msra.mxu0 %v281
        %397 = vmatprep.subr.mxu0 %v286
        %398 = vmatpush1.msra.mxu0 %v285
        %399 = vmatprep.subr.mxu0 %v290
        %400 = vmatpush1.msra.mxu0 %v289
        %401 = vmatprep.subr.mxu0 %v294
        %402 = vmatpush1.msra.mxu0 %v293
        %403 = vmatprep.subr.mxu0 %v298
        %404 = vmatpush1.msra.mxu0 %v297
        %405 = vmatprep.subr.mxu0 %v302
        %406 = vmatpush1.msra.mxu0 %v301
        %407 = vmatprep.subr.mxu0 %v306
        %408 = vmatpush1.msra.mxu0 %v305
        %409 = vmatprep.subr.mxu0 %v310
        %410 = vmatpush1.msra.mxu0 %v309
        %411 = vmatprep.subr.mxu0 %v314
        %412 = vmatpush1.msra.mxu0 %v313
        %413 = vmatprep.subr.mxu0 %v318
        %414 = vmatpush1.msra.mxu0 %v317
        %415 = vmatprep.subr.mxu0 %v322
        %416 = vmatpush1.msra.mxu0 %v321
        %417 = vmatprep.subr.mxu0 %v326
        %418 = vmatpush1.msra.mxu0 %v325
        %419 = vmatprep.subr.mxu0 %v330
        %420 = vmatpush1.msra.mxu0 %v329
        %421 = vmatprep.subr.mxu0 %v334
        %422 = vmatpush1.msra.mxu0 %v333
        %423 = vmatprep.subr.mxu0 %v338
        %424 = vmatpush1.msra.mxu0 %v337
        %425 = vmatprep.subr.mxu0 %v342
        %426 = vmatpush1.msra.mxu0 %v341
        %427 = vmatprep.subr.mxu0 %v346
        %428 = vmatpush1.msra.mxu0 %v345
        %429 = vmatprep.subr.mxu0 %v350
        %430 = vmatpush1.msra.mxu0 %v349
        %431 = vmatprep.subr.mxu0 %v354
        %432 = vmatpush1.msra.mxu0 %v353
        %433 = vmatprep.subr.mxu0 %v358
        %434 = vmatpush1.msra.mxu0 %v357
        %435 = vmatprep.subr.mxu0 %v362
        %436 = vmatpush1.msra.mxu0 %v361
        %437 = vmatprep.subr.mxu0 %v366
        %438 = vmatpush1.msra.mxu0 %v365
        %439 = vmatprep.subr.mxu0 %v370
        %440 = vmatpush1.msra.mxu0 %v369
        %441 = vmatprep.subr.mxu0 %v374
        %442 = vmatpush1.msra.mxu0 %v373
        %443 = vmatprep.subr.mxu0 %v378
        %444 = vmatpush1.msra.mxu0 %v377
        %445 = vmatprep.mubr.f32.mxu0 %v252
        %446 = vmatmul.mubr.f32.gmra.mrb[0].mxu0 %v251
        %v447 = vpop.f32.mrb[0].mxu0
        %v448 = vadd.f32 0.0, %v447
        %v449 = vpop.f32.mrb[0].mxu0
        %v450 = vadd.f32 0.0, %v449
        %451 = vdwg.mxu0
        %452 = vmatprep.subr.mxu0 %v256
        %453 = vmatpush1.msra.mxu0 %v255
        %454 = vmatprep.subr.mxu0 %v260
        %455 = vmatpush1.msra.mxu0 %v259
        %456 = vmatprep.subr.mxu0 %v264
        %457 = vmatpush1.msra.mxu0 %v263
        %458 = vmatprep.subr.mxu0 %v268
        %459 = vmatpush1.msra.mxu0 %v267
        %460 = vmatprep.subr.mxu0 %v272
        %461 = vmatpush1.msra.mxu0 %v271
        %462 = vmatprep.subr.mxu0 %v276
        %463 = vmatpush1.msra.mxu0 %v275
        %464 = vmatprep.subr.mxu0 %v280
        %465 = vmatpush1.msra.mxu0 %v279
        %466 = vmatprep.subr.mxu0 %v284
        %467 = vmatpush1.msra.mxu0 %v283
        %468 = vmatprep.subr.mxu0 %v288
        %469 = vmatpush1.msra.mxu0 %v287
        %470 = vmatprep.subr.mxu0 %v292
        %471 = vmatpush1.msra.mxu0 %v291
        %472 = vmatprep.subr.mxu0 %v296
        %473 = vmatpush1.msra.mxu0 %v295
        %474 = vmatprep.subr.mxu0 %v300
        %475 = vmatpush1.msra.mxu0 %v299
        %476 = vmatprep.subr.mxu0 %v304
        %477 = vmatpush1.msra.mxu0 %v303
        %478 = vmatprep.subr.mxu0 %v308
        %479 = vmatpush1.msra.mxu0 %v307
        %480 = vmatprep.subr.mxu0 %v312
        %481 = vmatpush1.msra.mxu0 %v311
        %482 = vmatprep.subr.mxu0 %v316
        %483 = vmatpush1.msra.mxu0 %v315
        %484 = vmatprep.subr.mxu0 %v320
        %485 = vmatpush1.msra.mxu0 %v319
        %486 = vmatprep.subr.mxu0 %v324
        %487 = vmatpush1.msra.mxu0 %v323
        %488 = vmatprep.subr.mxu0 %v328
        %489 = vmatpush1.msra.mxu0 %v327
        %490 = vmatprep.subr.mxu0 %v332
        %491 = vmatpush1.msra.mxu0 %v331
        %492 = vmatprep.subr.mxu0 %v336
        %493 = vmatpush1.msra.mxu0 %v335
        %494 = vmatprep.subr.mxu0 %v340
        %495 = vmatpush1.msra.mxu0 %v339
        %496 = vmatprep.subr.mxu0 %v344
        %497 = vmatpush1.msra.mxu0 %v343
        %498 = vmatprep.subr.mxu0 %v348
        %499 = vmatpush1.msra.mxu0 %v347
        %500 = vmatprep.subr.mxu0 %v352
        %501 = vmatpush1.msra.mxu0 %v351
        %502 = vmatprep.subr.mxu0 %v356
        %503 = vmatpush1.msra.mxu0 %v355
        %504 = vmatprep.subr.mxu0 %v360
        %505 = vmatpush1.msra.mxu0 %v359
        %506 = vmatprep.subr.mxu0 %v364
        %507 = vmatpush1.msra.mxu0 %v363
        %508 = vmatprep.subr.mxu0 %v368
        %509 = vmatpush1.msra.mxu0 %v367
        %510 = vmatprep.subr.mxu0 %v372
        %511 = vmatpush1.msra.mxu0 %v371
        %512 = vmatprep.subr.mxu0 %v376
        %513 = vmatpush1.msra.mxu0 %v375
        %514 = vmatprep.subr.mxu0 %v380
        %515 = vmatpush1.msra.mxu0 %v379
        %516 = vmatprep.mubr.f32.mxu0 %v252
        %517 = vmatmul.mubr.f32.gmra.mrb[0].mxu0 %v251
        %v518 = vpop.f32.mrb[0].mxu0
        %v519 = vadd.f32 0.0, %v518
        %v520 = vpop.f32.mrb[0].mxu0
        %v521 = vadd.f32 0.0, %v520
        %522 = vdwg.mxu0
        %523 = vst [vmem:[%s223] sm:$0xff] %v448
        %524 = vst [vmem:[%s223 + $0x8] sm:$0xff] %v450
        %525 = vst [vmem:[%s223 + $0x10] sm:$0xff] %v519
        %526 = vst [vmem:[%s223 + $0x18] sm:$0xff] %v521
        %s527 = sand.u32 %s116, 1
        %s528 = scalar_lea.sflag [#allocation4], %s527
        %s529 = sand.u32 %s116, 1
        %s530 = smul.addr %s529, 32
        %s531 = scalar_lea.vmem [#allocation7], %s530
        // Predicated region
        $region41: #{tpu_custom_call.1} parent=31 // pred_check
          %p532 = pneg %p126
        $region42: #{tpu_custom_call.1} parent=31 // pred_check_branch
          %534 = sbr.rel (%p532) target = $region44
        $region43: #{tpu_custom_call.1} parent=31 // pred_region
          %s535 = smul.u32 4, %s26
          %s537 = ssub.s32 512, 512
          %538 = vsyncadd %s528, %s537
          %s539 = smul.addr %s25, 4
          %s540 = sadd.s32 %s535, %s539
          %s541 = smul.addr %s540, 128
          %s542 = scalar_lea.hbm %s3, %s541
          %s544 = sshll.u32 %s531, 4
          %s545 = int_to_ptr.vmem [resolvable:$true] %s544
          %547 = dma.vmem_to_hbm [thread:$0]  %s545, 512, %s542, %s528
        $region44: #{tpu_custom_call.1} parent=31 // pred_fallthru
          _
      $region32: #{tpu_custom_call.1} parent=5 // pred_fallthru
        _
      %p548 = scmp.le.s32.totalorder 2, %s16
      // Predicated region
      $region45: #{tpu_custom_call.1} parent=5 // pred_check
        %p549 = pneg %p548
      $region46: #{tpu_custom_call.1} parent=5 // pred_check_branch
        %551 = sbr.rel (%p549) target = $region48
      $region47: #{tpu_custom_call.1} parent=5 // pred_region
        %s552 = ssub.s32 %s16, 2
        // Predicated region
        $region49: #{tpu_custom_call.1} parent=47 // pred_check
          %p553 = pneg %p132
        $region50: #{tpu_custom_call.1} parent=47 // pred_check_branch
          %555 = sbr.rel (%p553) target = $region52
        $region51: #{tpu_custom_call.1} parent=47 // pred_region
          %s556 = sand.u32 %s117, 1
          %s557 = scalar_lea.sflag [#allocation4], %s556
          %s558 = sand.u32 %s117, 1
          %s559 = smul.addr %s558, 32
          %s560 = scalar_lea.vmem [#allocation7], %s559
          %561 = dma.done %s557, 512
        $region52: #{tpu_custom_call.1} parent=47 // pred_fallthru
          _
      $region48: #{tpu_custom_call.1} parent=5 // pred_fallthru
        _
    $region6: #{tpu_custom_call.1} parent=1 // loop_footer
      %s20 = sadd.s32 1, %s16
    $region7: #{tpu_custom_call.1} parent=1 // loop_footer_branch
      %15 = sbr.rel target = $region3
    $region8: #{tpu_custom_call.1} parent=1 // loop_exit
      _
    %562 = vsyncpa [#allocation3], 1
    %s563 = scalar_lea.sflag [#allocation3], 1
    %564 = vsyncpa %s563, 1
    %565 = vsyncpa [#allocation6], 1
    %566 = vsyncpa [#allocation4], 1
    %s567 = scalar_lea.sflag [#allocation4], 1
    %568 = vsyncpa %s567, 1

</llo_original>
